<compile_context>
chip_gen: v7x
topology: tpu7x:2x2x1
jax: 0.10.0
libtpu: 0.0.40
codegen_flags: <defaults>
</compile_context>

<pallas_src>
import math
from functools import partial

import jax
import jax.numpy as jnp
from jax import lax
from jax.experimental import pallas as pl
from jax.experimental.pallas import tpu as pltpu


def explainer_fwd_kernel(node_idx_ref, mask_ref, adj_ref, tm_ref, x_ref, w_ref,
                         res_ref, madj_ref):
    N = adj_ref.shape[0]
    B, T, _, C = x_ref.shape
    K = node_idx_ref.shape[0]

    # ---- hoisted SMEM scalar reads (ahead of the VMEM stores) --------------
    # Out-of-range node indices are clamped to [0, N-1] (documented; PyTorch
    # indexing would raise instead).
    nis = [jnp.minimum(jnp.maximum(node_idx_ref[k], 0), N - 1) for k in range(K)]

    # ---- _masked_adj(): sym = sigmoid(mask); sym = (sym + sym.T)/2;
    #      masked_adj = adj * sym with zeroed diagonal (single fused select) --
    sig = jax.nn.sigmoid(mask_ref[...])                    # one EUP pass, (N, N)
    sym = 0.5 * (sig + jnp.transpose(sig))                 # XLU transpose (free slot)
    rows = lax.broadcasted_iota(jnp.int32, (N, N), 0)
    cols = lax.broadcasted_iota(jnp.int32, (N, N), 1)
    madj = jnp.where(rows == cols, 0.0, adj_ref[...] * sym)
    madj_ref[...] = madj
    madj_t = jnp.transpose(madj)                           # madj_t[n, m] = madj[m, n]

    # ---- time masking: einsum('xy,bntc->bnxc', sigmoid(tm), x^T) contracts
    #      BOTH y and t, so it factorizes into
    #      (sum_y sigmoid(tm)[tau, y]) * (sum_t x[b, t, n, c]) ----------------
    s_tm = jnp.sum(jax.nn.sigmoid(tm_ref[...]), axis=1, keepdims=True)      # (T, 1)
    x_tsum = jnp.sum(x_ref[...], axis=1)                                    # (B, N, C)

    # ---- synthetic linear GCN readout, batched over B in-kernel ------------
    #   g[b, n, o] = sum_c x_tsum[b, n, c] * W[c, o]
    #   (C statically unrolled, pure VPU broadcast-multiplies; no MXU)
    w_val = w_ref[...]                                                      # (C, O)
    g = x_tsum[:, :, 0:1] * w_val[0:1, :]
    for c in range(1, C):
        g = g + x_tsum[:, :, c:c + 1] * w_val[c:c + 1, :]                   # (B, N, O)

    # ---- per node-idx: one-hot row pick of madj + final contractions -------
    lane_ids = lax.broadcasted_iota(jnp.int32, (1, N), 1)
    for k in range(K):
        oh = (lane_ids == nis[k]).astype(jnp.float32)                       # (1, N)
        # r[n, 0] = madj[ni, n]  (one-hot lane select on madj^T, lane reduce)
        r = jnp.sum(madj_t * oh, axis=1, keepdims=True)                     # (N, 1)
        # y[b, 0, o] = sum_n r[n] * g[b, n, o]   (sublane reduce)
        y = jnp.sum(r[None, :, :] * g, axis=1, keepdims=True)               # (B, 1, O)
        # res[b, t, o] = s_tm[t] * y[b, o], stored directly in final layout
        out_k = (s_tm[None, :, :] * y).astype(res_ref.dtype)                # (B, T, O)
        if len(res_ref.shape) == 3:        # single node_idx: res_ref is (B, T, O)
            res_ref[...] = out_k
        else:                              # batched node indices: (K, B, T, O)
            res_ref[k] = out_k


def _explainer_forward_impl(node_idx_arr, mask, adj, time_mask, x, w, *, single):
    B, T, N, C = x.shape
    O = w.shape[1]
    K = node_idx_arr.shape[0]
    res_shape = (B, T, O) if single else (K, B, T, O)

    vmem = pl.BlockSpec(memory_space=pltpu.MemorySpace.VMEM)
    smem = pl.BlockSpec(memory_space=pltpu.MemorySpace.SMEM)

    return pl.pallas_call(
        explainer_fwd_kernel,
        out_shape=(jax.ShapeDtypeStruct(res_shape, jnp.float32),
                   jax.ShapeDtypeStruct((N, N), jnp.float32)),
        in_specs=[smem, vmem, vmem, vmem, vmem, vmem],
        out_specs=(vmem, vmem),
    )(node_idx_arr, mask, adj, time_mask, x, w)


_explainer_forward_jit = jax.jit(_explainer_forward_impl, static_argnames=("single",))


def explainer_forward(node_idx, mask, adj, time_mask, x, w):
    """res, masked_adj = forward(node_idx).

    node_idx may be a Python int / 0-d array (res is (B, T, O)) or a 1-D array
    of K node indices (res is (K, B, T, O)); all K explanations come from one
    pallas_call so the fixed call/DMA latency is amortized.
    """
    idx = jnp.asarray(node_idx, dtype=jnp.int32)
    single = idx.ndim == 0
    idx = jnp.atleast_1d(idx)
    return _explainer_forward_jit(idx, mask, adj, time_mask, x, w, single=single)


def reference_forward(node_idx, mask, adj, time_mask, x, w):
    """Pure-JAX replica of the PyTorch forward (torch semantics, literal einsum)."""
    N = adj.shape[0]
    sym = jax.nn.sigmoid(mask)
    sym = 0.5 * (sym + sym.T)
    madj = adj * sym * (jnp.ones((N, N)) - jnp.eye(N))
    tm = jax.nn.sigmoid(time_mask)
    xt = jnp.swapaxes(x, 1, 2)                               # (B, N, T, C)
    xm = jnp.einsum('xy,bntc->bnxc', tm, xt)                 # contracts y and t
    xm = jnp.swapaxes(xm, 1, 2)                              # (B, T, N, C)
    # synthetic model: one graph-conv layer + linear readout
    h = jnp.einsum('nm,btmc->btnc', madj, xm)
    ypred = jnp.einsum('btnc,co->btno', h, w)
    return ypred[:, :, node_idx, :], madj


if __name__ == "__main__":
    B, T, N, C, O = 2, 8, 16, 4, 4
    node_idx = 3

    key = jax.random.PRNGKey(0)
    k1, k2, k3, k4 = jax.random.split(key, 4)

    # construct_edge_mask(num_nodes, 'normal'): normal(mean=1, std=gain(relu)*sqrt(2/(N+N)))
    std = math.sqrt(2.0) * math.sqrt(2.0 / (N + N))
    mask = (1.0 + std * jax.random.normal(k1, (N, N))).astype(jnp.float32)
    # construct_time_mask(..., 'constant'): zeros
    time_mask = jnp.zeros((T, C), dtype=jnp.float32)
    # adjacency: deterministic symmetric 0/1 graph
    adj_raw = (jax.random.uniform(k2, (N, N)) > 0.5).astype(jnp.float32)
    adj = jnp.maximum(adj_raw, adj_raw.T)
    # inputs x (B, T, N, C) and synthetic model weight W (C, O)
    x = jax.random.normal(k3, (B, T, N, C), dtype=jnp.float32)
    w = (0.1 * jax.random.normal(k4, (C, O))).astype(jnp.float32)

    # --- single node-idx path: output comes straight out in (B, T, O) -------
    res, madj = explainer_forward(node_idx, mask, adj, time_mask, x, w)
    res = jax.block_until_ready(res)
    madj = jax.block_until_ready(madj)

    res_ref, madj_ref = reference_forward(node_idx, mask, adj, time_mask, x, w)
    assert res.shape == (B, T, O) and madj.shape == (N, N)
    assert jnp.allclose(madj, madj_ref, rtol=1e-5, atol=1e-5), "masked_adj mismatch"
    assert jnp.allclose(res, res_ref, rtol=1e-4, atol=1e-4), "forward output mismatch"

    # --- batched node-idx path: K explanations from a single pallas_call ----
    node_ids = [0, 3, 7]
    res_k, madj_k = explainer_forward(jnp.asarray(node_ids, dtype=jnp.int32),
                                      mask, adj, time_mask, x, w)
    res_k = jax.block_until_ready(res_k)
    assert res_k.shape == (len(node_ids), B, T, O)
    assert jnp.allclose(madj_k, madj_ref, rtol=1e-5, atol=1e-5), "masked_adj mismatch (batched)"
    for i, ni in enumerate(node_ids):
        ref_i, _ = reference_forward(ni, mask, adj, time_mask, x, w)
        assert jnp.allclose(res_k[i], ref_i, rtol=1e-4, atol=1e-4), f"node {ni} mismatch"

    print("KERNEL_OK")
</pallas_src>

<mosaic_0001>
module attributes {stable_mosaic.version = 11 : i64} {
  func.func @explainer_fwd_kernel(%arg0: memref<1xi32, #tpu.memory_space<smem>>, %arg1: memref<16x16xf32, #tpu.memory_space<vmem>>, %arg2: memref<16x16xf32, #tpu.memory_space<vmem>>, %arg3: memref<8x4xf32, #tpu.memory_space<vmem>>, %arg4: memref<2x8x16x4xf32, #tpu.memory_space<vmem>>, %arg5: memref<4x4xf32, #tpu.memory_space<vmem>>, %arg6: memref<2x8x4xf32, #tpu.memory_space<vmem>>, %arg7: memref<16x16xf32, #tpu.memory_space<vmem>>) attributes {dimension_semantics = [], scalar_prefetch = 0 : i64, scratch_operands = 0 : i64, tpu.core_type = #tpu.core_type<tc>} {
    %c0 = arith.constant 0 : index
    %0 = memref.load %arg0[%c0] : memref<1xi32, #tpu.memory_space<smem>>
    %c0_i32 = arith.constant 0 : i32
    %1 = arith.maxsi %0, %c0_i32 : i32
    %c15_i32 = arith.constant 15 : i32
    %2 = arith.minsi %1, %c15_i32 : i32
    %c0_0 = arith.constant 0 : index
    %c0_1 = arith.constant 0 : index
    %3 = vector.load %arg1[%c0_0, %c0_1] : memref<16x16xf32, #tpu.memory_space<vmem>>, vector<16x16xf32>
    %4 = arith.negf %3 : vector<16x16xf32>
    %5 = math.exp %4 : vector<16x16xf32>
    %cst = arith.constant 1.000000e+00 : f32
    %6 = vector.broadcast %cst : f32 to vector<16x16xf32>
    %7 = arith.addf %6, %5 : vector<16x16xf32>
    %8 = arith.divf %6, %7 : vector<16x16xf32>
    %9 = tpu.transpose %8, [1, 0] : vector<16x16xf32> -> vector<16x16xf32>
    %10 = arith.addf %8, %9 : vector<16x16xf32>
    %cst_2 = arith.constant 5.000000e-01 : f32
    %11 = vector.broadcast %cst_2 : f32 to vector<16x16xf32>
    %12 = arith.mulf %11, %10 : vector<16x16xf32>
    %13 = tpu.iota {dimensions = array<i32: 0>} : vector<16x16xi32>
    %14 = tpu.iota {dimensions = array<i32: 1>} : vector<16x16xi32>
    %15 = arith.cmpi eq, %13, %14 : vector<16x16xi32>
    %c0_3 = arith.constant 0 : index
    %c0_4 = arith.constant 0 : index
    %16 = vector.load %arg2[%c0_3, %c0_4] : memref<16x16xf32, #tpu.memory_space<vmem>>, vector<16x16xf32>
    %17 = arith.mulf %16, %12 : vector<16x16xf32>
    %cst_5 = arith.constant 0.000000e+00 : f32
    %18 = vector.broadcast %cst_5 : f32 to vector<16x16xf32>
    %19 = arith.select %15, %18, %17 : vector<16x16xi1>, vector<16x16xf32>
    %c0_6 = arith.constant 0 : index
    %c0_7 = arith.constant 0 : index
    %20 = vector.load %arg7[%c0_6, %c0_7] : memref<16x16xf32, #tpu.memory_space<vmem>>, vector<16x16xf32>
    tpu.vector_store %arg7[%c0_6, %c0_7], %19 {strides = array<i32>} : memref<16x16xf32, #tpu.memory_space<vmem>>, vector<16x16xf32>,
    %21 = tpu.transpose %19, [1, 0] : vector<16x16xf32> -> vector<16x16xf32>
    %c0_8 = arith.constant 0 : index
    %c0_9 = arith.constant 0 : index
    %22 = vector.load %arg3[%c0_8, %c0_9] : memref<8x4xf32, #tpu.memory_space<vmem>>, vector<8x4xf32>
    %23 = arith.negf %22 : vector<8x4xf32>
    %24 = math.exp %23 : vector<8x4xf32>
    %cst_10 = arith.constant 1.000000e+00 : f32
    %25 = vector.broadcast %cst_10 : f32 to vector<8x4xf32>
    %26 = arith.addf %25, %24 : vector<8x4xf32>
    %27 = arith.divf %25, %26 : vector<8x4xf32>
    %cst_11 = arith.constant dense<0.000000e+00> : vector<8xf32>
    %28 = vector.multi_reduction <add>, %27, %cst_11 [1] : vector<8x4xf32> to vector<8xf32>
    %29 = vector.shape_cast %28 : vector<8xf32> to vector<8x1xf32>
    %c0_12 = arith.constant 0 : index
    %c0_13 = arith.constant 0 : index
    %c0_14 = arith.constant 0 : index
    %c0_15 = arith.constant 0 : index
    %30 = vector.load %arg4[%c0_12, %c0_13, %c0_14, %c0_15] : memref<2x8x16x4xf32, #tpu.memory_space<vmem>>, vector<2x8x16x4xf32>
    %cst_16 = arith.constant dense<0.000000e+00> : vector<2x16x4xf32>
    %31 = vector.multi_reduction <add>, %30, %cst_16 [1] : vector<2x8x16x4xf32> to vector<2x16x4xf32>
    %c0_17 = arith.constant 0 : index
    %c0_18 = arith.constant 0 : index
    %32 = vector.load %arg5[%c0_17, %c0_18] : memref<4x4xf32, #tpu.memory_space<vmem>>, vector<4x4xf32>
    %33 = vector.extract_strided_slice %31 {offsets = [0, 0, 0], sizes = [2, 16, 1], strides = [1, 1, 1]} : vector<2x16x4xf32> to vector<2x16x1xf32>
    %34 = vector.extract_strided_slice %32 {offsets = [0, 0], sizes = [1, 4], strides = [1, 1]} : vector<4x4xf32> to vector<1x4xf32>
    %35 = vector.shape_cast %34 : vector<1x4xf32> to vector<1x1x4xf32>
    %36 = vector.broadcast %33 : vector<2x16x1xf32> to vector<2x16x4xf32>
    %37 = vector.broadcast %35 : vector<1x1x4xf32> to vector<2x16x4xf32>
    %38 = arith.mulf %36, %37 : vector<2x16x4xf32>
    %39 = vector.extract_strided_slice %31 {offsets = [0, 0, 1], sizes = [2, 16, 1], strides = [1, 1, 1]} : vector<2x16x4xf32> to vector<2x16x1xf32>
    %40 = vector.extract_strided_slice %32 {offsets = [1, 0], sizes = [1, 4], strides = [1, 1]} : vector<4x4xf32> to vector<1x4xf32>
    %41 = vector.shape_cast %40 : vector<1x4xf32> to vector<1x1x4xf32>
    %42 = vector.broadcast %39 : vector<2x16x1xf32> to vector<2x16x4xf32>
    %43 = vector.broadcast %41 : vector<1x1x4xf32> to vector<2x16x4xf32>
    %44 = arith.mulf %42, %43 : vector<2x16x4xf32>
    %45 = arith.addf %38, %44 : vector<2x16x4xf32>
    %46 = vector.extract_strided_slice %31 {offsets = [0, 0, 2], sizes = [2, 16, 1], strides = [1, 1, 1]} : vector<2x16x4xf32> to vector<2x16x1xf32>
    %47 = vector.extract_strided_slice %32 {offsets = [2, 0], sizes = [1, 4], strides = [1, 1]} : vector<4x4xf32> to vector<1x4xf32>
    %48 = vector.shape_cast %47 : vector<1x4xf32> to vector<1x1x4xf32>
    %49 = vector.broadcast %46 : vector<2x16x1xf32> to vector<2x16x4xf32>
    %50 = vector.broadcast %48 : vector<1x1x4xf32> to vector<2x16x4xf32>
    %51 = arith.mulf %49, %50 : vector<2x16x4xf32>
    %52 = arith.addf %45, %51 : vector<2x16x4xf32>
    %53 = vector.extract_strided_slice %31 {offsets = [0, 0, 3], sizes = [2, 16, 1], strides = [1, 1, 1]} : vector<2x16x4xf32> to vector<2x16x1xf32>
    %54 = vector.extract_strided_slice %32 {offsets = [3, 0], sizes = [1, 4], strides = [1, 1]} : vector<4x4xf32> to vector<1x4xf32>
    %55 = vector.shape_cast %54 : vector<1x4xf32> to vector<1x1x4xf32>
    %56 = vector.broadcast %53 : vector<2x16x1xf32> to vector<2x16x4xf32>
    %57 = vector.broadcast %55 : vector<1x1x4xf32> to vector<2x16x4xf32>
    %58 = arith.mulf %56, %57 : vector<2x16x4xf32>
    %59 = arith.addf %52, %58 : vector<2x16x4xf32>
    %60 = tpu.iota {dimensions = array<i32: 1>} : vector<1x16xi32>
    %61 = vector.broadcast %2 : i32 to vector<1x16xi32>
    %62 = arith.cmpi eq, %60, %61 : vector<1x16xi32>
    %63 = arith.extui %62 : vector<1x16xi1> to vector<1x16xi32>
    %64 = arith.sitofp %63 : vector<1x16xi32> to vector<1x16xf32>
    %65 = vector.broadcast %64 : vector<1x16xf32> to vector<16x16xf32>
    %66 = arith.mulf %21, %65 : vector<16x16xf32>
    %cst_19 = arith.constant dense<0.000000e+00> : vector<16xf32>
    %67 = vector.multi_reduction <add>, %66, %cst_19 [1] : vector<16x16xf32> to vector<16xf32>
    %68 = vector.shape_cast %67 : vector<16xf32> to vector<16x1xf32>
    %69 = vector.shape_cast %68 : vector<16x1xf32> to vector<1x16x1xf32>
    %70 = vector.broadcast %69 : vector<1x16x1xf32> to vector<2x16x4xf32>
    %71 = arith.mulf %70, %59 : vector<2x16x4xf32>
    %cst_20 = arith.constant dense<0.000000e+00> : vector<2x4xf32>
    %72 = vector.multi_reduction <add>, %71, %cst_20 [1] : vector<2x16x4xf32> to vector<2x4xf32>
    %73 = vector.shape_cast %72 : vector<2x4xf32> to vector<2x1x4xf32>
    %74 = vector.shape_cast %29 : vector<8x1xf32> to vector<1x8x1xf32>
    %75 = vector.broadcast %74 : vector<1x8x1xf32> to vector<2x8x4xf32>
    %76 = vector.broadcast %73 : vector<2x1x4xf32> to vector<2x8x4xf32>
    %77 = arith.mulf %75, %76 : vector<2x8x4xf32>
    %c0_21 = arith.constant 0 : index
    %c0_22 = arith.constant 0 : index
    %c0_23 = arith.constant 0 : index
    %78 = vector.load %arg6[%c0_21, %c0_22, %c0_23] : memref<2x8x4xf32, #tpu.memory_space<vmem>>, vector<2x8x4xf32>
    tpu.vector_store %arg6[%c0_21, %c0_22, %c0_23], %77 {strides = array<i32>} : memref<2x8x4xf32, #tpu.memory_space<vmem>>, vector<2x8x4xf32>,
    return
  }
}

</mosaic_0001>

<llo_original>
// kernel: _explainer_forward_impl.1
$region0: #{_explainer_forward_impl.1}
  #allocation0 [shape = 'u32[]', space=smem, size = 0x4, offset = 0x4, fixed_abs, tag = 'smem constant byte address 0x4 - core index']
  #allocation1 [shape = 'u32[144,128]{1,0:T(1,128)}', space=vmem, size = 0x12000, scoped, tag = 'internal scratch']
  #allocation2 [shape = 's32[1]{0:T(128)S(6)}', space=smem, size = 0x200, scoped, tag = 'scoped memory for _explainer_forward_impl.1']
  %s0 = inlined_call_operand.<no memory space> [shape: s32[1], index: 0, kind: input, shape index: {}]
  %s1 = inlined_call_operand.vmem [shape: f32[16,16], index: 1, kind: input, shape index: {}]
  %s2 = inlined_call_operand.vmem [shape: f32[16,16], index: 2, kind: input, shape index: {}]
  %s3 = inlined_call_operand.vmem [shape: f32[8,4], index: 3, kind: input, shape index: {}]
  %s4 = inlined_call_operand.vmem [shape: f32[2,8,16,4], index: 4, kind: input, shape index: {}]
  %s5 = inlined_call_operand.vmem [shape: f32[4,4], index: 5, kind: input, shape index: {}]
  %s6 = inlined_call_operand.vmem [shape: f32[2,8,4], index: 6, kind: output, shape index: {0}]
  %s7 = inlined_call_operand.hbm [shape: f32[16,16], index: 7, kind: output, shape index: {1}]
  %8 = xla_tuple %s6, %s7
  %s9 = sld [smem:[#allocation0]]
  $region42: #{_explainer_forward_impl.1} parent=0
    _
  %s11 = ssub.s32 1, %s9
  %s12 = scalar_select 0, %s11, %s9
  %13 = sst [smem:[#allocation2]] %s0
  $region1: #{_explainer_forward_impl.1} parent=0
    #allocation3 [shape = 'u8[8192]{0}', space=vmem, size = 0x2000, scoped, tag = 'output window, operand 1, single buffered']
    #allocation4 [shape = 's32[1]{0}', space=sflag, size = 0x4, scoped, tag = 'scoped memory for _explainer_forward_impl.1']
    %14 = vsyncpa [#allocation4], 0
    // Predicated region
    $region2: #{_explainer_forward_impl.1} parent=1 // pred_check
      _
    $region3: #{_explainer_forward_impl.1} parent=1 // pred_check_branch
      %16 = sbr.rel (0) target = $region5
    $region4: #{_explainer_forward_impl.1} parent=1 // pred_region
      _
    $region5: #{_explainer_forward_impl.1} parent=1 // pred_fallthru
      _
    // Predicated region
    $region6: #{_explainer_forward_impl.1} parent=1 // pred_check
      _
    $region7: #{_explainer_forward_impl.1} parent=1 // pred_check_branch
      %18 = sbr.rel (0) target = $region9
    $region8: #{_explainer_forward_impl.1} parent=1 // pred_region
      _
    $region9: #{_explainer_forward_impl.1} parent=1 // pred_fallthru
      _
    // Predicated region
    $region10: #{_explainer_forward_impl.1} parent=1 // pred_check
      _
    $region11: #{_explainer_forward_impl.1} parent=1 // pred_check_branch
      %20 = sbr.rel (0) target = $region13
    $region12: #{_explainer_forward_impl.1} parent=1 // pred_region
      _
    $region13: #{_explainer_forward_impl.1} parent=1 // pred_fallthru
      _
    // Predicated region
    $region14: #{_explainer_forward_impl.1} parent=1 // pred_check
      _
    $region15: #{_explainer_forward_impl.1} parent=1 // pred_check_branch
      %22 = sbr.rel (0) target = $region17
    $region16: #{_explainer_forward_impl.1} parent=1 // pred_region
      _
    $region17: #{_explainer_forward_impl.1} parent=1 // pred_fallthru
      _
    // Predicated region
    $region18: #{_explainer_forward_impl.1} parent=1 // pred_check
      _
    $region19: #{_explainer_forward_impl.1} parent=1 // pred_check_branch
      %24 = sbr.rel (0) target = $region21
    $region20: #{_explainer_forward_impl.1} parent=1 // pred_region
      _
    $region21: #{_explainer_forward_impl.1} parent=1 // pred_fallthru
      _
    // Predicated region
    $region22: #{_explainer_forward_impl.1} parent=1 // pred_check
      _
    $region23: #{_explainer_forward_impl.1} parent=1 // pred_check_branch
      %26 = sbr.rel (0) target = $region25
    $region24: #{_explainer_forward_impl.1} parent=1 // pred_region
      _
    $region25: #{_explainer_forward_impl.1} parent=1 // pred_fallthru
      _
    %s27 = sld [smem:[#allocation2]]
    %p28 = scmp.gt.s32.totalorder %s27, 0
    %s29 = scalar_select %p28, %s27, 0
    %p30 = scmp.lt.s32.totalorder %s29, 15
    %s31 = scalar_select %p30, %s29, 15
    %v32 = vld [vmem:[%s1] sm:$0xff]
    %v33 = vld [vmem:[%s1 + $0x8] sm:$0xff]
    %v34 = vxor.u32 %v32, 2147483648
    %v35 = vxor.u32 %v33, 2147483648
    %v36 = vmul.f32 %v34, 1.442695
    %v37 = vpow.pop %v36
    %v38 = vmul.f32 %v35, 1.442695
    %v39 = vpow.pop %v38
    %v40 = vadd.f32 %v37, 1.0
    %v41 = vadd.f32 %v39, 1.0
    %v42 = vrcp.pop %v40
    %v43 = vmul.f32 1.0, %v42
    %v44 = vrcp.pop %v41
    %v45 = vmul.f32 1.0, %v44
    %46 = vxpose.xlu0.b32.start [1/16] %v43, 128
    %47 = vxpose.xlu0.b32.cont [2/16] %v45, 128
    %48 = vxpose.xlu0.b32.cont [3/16] 0.0, 128
    %49 = vxpose.xlu0.b32.cont [4/16] 0.0, 128
    %50 = vxpose.xlu0.b32.cont [5/16] 0.0, 128
    %51 = vxpose.xlu0.b32.cont [6/16] 0.0, 128
    %52 = vxpose.xlu0.b32.cont [7/16] 0.0, 128
    %53 = vxpose.xlu0.b32.cont [8/16] 0.0, 128
    %54 = vxpose.xlu0.b32.cont [9/16] 0.0, 128
    %55 = vxpose.xlu0.b32.cont [10/16] 0.0, 128
    %56 = vxpose.xlu0.b32.cont [11/16] 0.0, 128
    %57 = vxpose.xlu0.b32.cont [12/16] 0.0, 128
    %58 = vxpose.xlu0.b32.cont [13/16] 0.0, 128
    %59 = vxpose.xlu0.b32.cont [14/16] 0.0, 128
    %60 = vxpose.xlu0.b32.cont [15/16] 0.0, 128
    %61 = vxpose.xlu0.b32.end [16/16] 0.0, 128
    %v62 = vpop.trf.xlu0
    %v63 = vpop.trf.xlu0
    %v64 = vpop.trf.xlu0
    %v65 = vpop.trf.xlu0
    %v66 = vpop.trf.xlu0
    %v67 = vpop.trf.xlu0
    %v68 = vpop.trf.xlu0
    %v69 = vpop.trf.xlu0
    %v70 = vpop.trf.xlu0
    %v71 = vpop.trf.xlu0
    %v72 = vpop.trf.xlu0
    %v73 = vpop.trf.xlu0
    %v74 = vpop.trf.xlu0
    %v75 = vpop.trf.xlu0
    %v76 = vpop.trf.xlu0
    %v77 = vpop.trf.xlu0
    %v78 = vadd.f32 %v43, %v62
    %v79 = vadd.f32 %v45, %v63
    %v80 = vmul.f32 %v78, 0.5
    %v81 = vmul.f32 %v79, 0.5
    %v82 = vlaneseq
    %v83 = vshrl.u32 %v82, 7
    %v84 = vadd.s32 %v83, 8
    %v85 = vlaneseq
    %v86 = vand.u32 %v85, 127
    %vm87 = vcmp.eq.s32.totalorder %v83, %v86
    %vm88 = vcmp.eq.s32.totalorder %v84, %v86
    %v89 = vld [vmem:[%s2] sm:$0xff]
    %v90 = vld [vmem:[%s2 + $0x8] sm:$0xff]
    %v91 = vmul.f32 %v89, %v80
    %v92 = vmul.f32 %v90, %v81
    %v93 = vsel %vm87, 0.0, %v91
    %v94 = vsel %vm88, 0.0, %v92
    %vm95 = vcmask 130048
    %96 = vst.msk [vmem:[#allocation3] sm:$0xff] %vm95, %v93
    %97 = vst.msk [vmem:[#allocation3 + $0x8] sm:$0xff] %vm95, %v94
    %98 = vxpose.xlu0.b32.start [1/16] %v93, 128
    %99 = vxpose.xlu0.b32.cont [2/16] %v94, 128
    %100 = vxpose.xlu0.b32.cont [3/16] 0.0, 128
    %101 = vxpose.xlu0.b32.cont [4/16] 0.0, 128
    %102 = vxpose.xlu0.b32.cont [5/16] 0.0, 128
    %103 = vxpose.xlu0.b32.cont [6/16] 0.0, 128
    %104 = vxpose.xlu0.b32.cont [7/16] 0.0, 128
    %105 = vxpose.xlu0.b32.cont [8/16] 0.0, 128
    %106 = vxpose.xlu0.b32.cont [9/16] 0.0, 128
    %107 = vxpose.xlu0.b32.cont [10/16] 0.0, 128
    %108 = vxpose.xlu0.b32.cont [11/16] 0.0, 128
    %109 = vxpose.xlu0.b32.cont [12/16] 0.0, 128
    %110 = vxpose.xlu0.b32.cont [13/16] 0.0, 128
    %111 = vxpose.xlu0.b32.cont [14/16] 0.0, 128
    %112 = vxpose.xlu0.b32.cont [15/16] 0.0, 128
    %113 = vxpose.xlu0.b32.end [16/16] 0.0, 128
    %v114 = vpop.trf.xlu0
    %v115 = vpop.trf.xlu0
    %v116 = vpop.trf.xlu0
    %v117 = vpop.trf.xlu0
    %v118 = vpop.trf.xlu0
    %v119 = vpop.trf.xlu0
    %v120 = vpop.trf.xlu0
    %v121 = vpop.trf.xlu0
    %v122 = vpop.trf.xlu0
    %v123 = vpop.trf.xlu0
    %v124 = vpop.trf.xlu0
    %v125 = vpop.trf.xlu0
    %v126 = vpop.trf.xlu0
    %v127 = vpop.trf.xlu0
    %v128 = vpop.trf.xlu0
    %v129 = vpop.trf.xlu0
    %v130 = vld [vmem:[%s3] sm:$0xff]
    %v131 = vxor.u32 %v130, 2147483648
    %v132 = vmul.f32 %v131, 1.442695
    %v133 = vpow.pop %v132
    %v134 = vadd.f32 %v133, 1.0
    %v135 = vrcp.pop %v134
    %v136 = vmul.f32 1.0, %v135
    %vm137 = vcmask 31744
    %v138 = vsel %vm137, %v136, 0.0
    %139 = vadd.xlane.f32.xlu0 %v138
    %v140 = vpop.xlane.xlu0 %139
    %v141 = vld [vmem:[%s4] sm:$0xff]
    %v142 = vld [vmem:[%s4 + $0x8] sm:$0xff]
    %v143 = vld [vmem:[%s4 + $0x10] sm:$0xff]
    %v144 = vld [vmem:[%s4 + $0x18] sm:$0xff]
    %v145 = vld [vmem:[%s4 + $0x20] sm:$0xff]
    %v146 = vld [vmem:[%s4 + $0x28] sm:$0xff]
    %v147 = vld [vmem:[%s4 + $0x30] sm:$0xff]
    %v148 = vld [vmem:[%s4 + $0x38] sm:$0xff]
    %v149 = vld [vmem:[%s4 + $0x40] sm:$0xff]
    %v150 = vld [vmem:[%s4 + $0x48] sm:$0xff]
    %v151 = vld [vmem:[%s4 + $0x50] sm:$0xff]
    %v152 = vld [vmem:[%s4 + $0x58] sm:$0xff]
    %v153 = vld [vmem:[%s4 + $0x60] sm:$0xff]
    %v154 = vld [vmem:[%s4 + $0x68] sm:$0xff]
    %v155 = vld [vmem:[%s4 + $0x70] sm:$0xff]
    %v156 = vld [vmem:[%s4 + $0x78] sm:$0xff]
    %v157 = vld [vmem:[%s4 + $0x80] sm:$0xff]
    %v158 = vld [vmem:[%s4 + $0x88] sm:$0xff]
    %v159 = vld [vmem:[%s4 + $0x90] sm:$0xff]
    %v160 = vld [vmem:[%s4 + $0x98] sm:$0xff]
    %v161 = vld [vmem:[%s4 + $0xa0] sm:$0xff]
    %v162 = vld [vmem:[%s4 + $0xa8] sm:$0xff]
    %v163 = vld [vmem:[%s4 + $0xb0] sm:$0xff]
    %v164 = vld [vmem:[%s4 + $0xb8] sm:$0xff]
    %v165 = vld [vmem:[%s4 + $0xc0] sm:$0xff]
    %v166 = vld [vmem:[%s4 + $0xc8] sm:$0xff]
    %v167 = vld [vmem:[%s4 + $0xd0] sm:$0xff]
    %v168 = vld [vmem:[%s4 + $0xd8] sm:$0xff]
    %v169 = vld [vmem:[%s4 + $0xe0] sm:$0xff]
    %v170 = vld [vmem:[%s4 + $0xe8] sm:$0xff]
    %v171 = vld [vmem:[%s4 + $0xf0] sm:$0xff]
    %v172 = vld [vmem:[%s4 + $0xf8] sm:$0xff]
    %v173 = vsel %vm137, %v141, 0.0
    %v174 = vsel %vm137, %v143, 0.0
    %v175 = vadd.f32 %v173, %v174
    %v176 = vsel %vm137, %v145, 0.0
    %v177 = vadd.f32 %v175, %v176
    %v178 = vsel %vm137, %v147, 0.0
    %v179 = vadd.f32 %v177, %v178
    %v180 = vsel %vm137, %v149, 0.0
    %v181 = vadd.f32 %v179, %v180
    %v182 = vsel %vm137, %v151, 0.0
    %v183 = vadd.f32 %v181, %v182
    %v184 = vsel %vm137, %v153, 0.0
    %v185 = vadd.f32 %v183, %v184
    %v186 = vsel %vm137, %v155, 0.0
    %v187 = vadd.f32 %v185, %v186
    %v188 = vsel %vm137, %v142, 0.0
    %v189 = vsel %vm137, %v144, 0.0
    %v190 = vadd.f32 %v188, %v189
    %v191 = vsel %vm137, %v146, 0.0
    %v192 = vadd.f32 %v190, %v191
    %v193 = vsel %vm137, %v148, 0.0
    %v194 = vadd.f32 %v192, %v193
    %v195 = vsel %vm137, %v150, 0.0
    %v196 = vadd.f32 %v194, %v195
    %v197 = vsel %vm137, %v152, 0.0
    %v198 = vadd.f32 %v196, %v197
    %v199 = vsel %vm137, %v154, 0.0
    %v200 = vadd.f32 %v198, %v199
    %v201 = vsel %vm137, %v156, 0.0
    %v202 = vadd.f32 %v200, %v201
    %v203 = vsel %vm137, %v157, 0.0
    %v204 = vsel %vm137, %v159, 0.0
    %v205 = vadd.f32 %v203, %v204
    %v206 = vsel %vm137, %v161, 0.0
    %v207 = vadd.f32 %v205, %v206
    %v208 = vsel %vm137, %v163, 0.0
    %v209 = vadd.f32 %v207, %v208
    %v210 = vsel %vm137, %v165, 0.0
    %v211 = vadd.f32 %v209, %v210
    %v212 = vsel %vm137, %v167, 0.0
    %v213 = vadd.f32 %v211, %v212
    %v214 = vsel %vm137, %v169, 0.0
    %v215 = vadd.f32 %v213, %v214
    %v216 = vsel %vm137, %v171, 0.0
    %v217 = vadd.f32 %v215, %v216
    %v218 = vsel %vm137, %v158, 0.0
    %v219 = vsel %vm137, %v160, 0.0
    %v220 = vadd.f32 %v218, %v219
    %v221 = vsel %vm137, %v162, 0.0
    %v222 = vadd.f32 %v220, %v221
    %v223 = vsel %vm137, %v164, 0.0
    %v224 = vadd.f32 %v222, %v223
    %v225 = vsel %vm137, %v166, 0.0
    %v226 = vadd.f32 %v224, %v225
    %v227 = vsel %vm137, %v168, 0.0
    %v228 = vadd.f32 %v226, %v227
    %v229 = vsel %vm137, %v170, 0.0
    %v230 = vadd.f32 %v228, %v229
    %v231 = vsel %vm137, %v172, 0.0
    %v232 = vadd.f32 %v230, %v231
    %v233 = vld [vmem:[%s5] sm:$0xf]
    %235 = vset.pattern.permute.xlu0 0
    %236 = vperm.xlu0 %235, %v187
    %v237 = vpop.permute.xlu0 %236
    %240 = vset.pattern.permute.xlu0 0
    %241 = vperm.xlu0 %240, %v202
    %v242 = vpop.permute.xlu0 %241
    %245 = vset.pattern.permute.xlu0 0
    %246 = vperm.xlu0 %245, %v217
    %v247 = vpop.permute.xlu0 %246
    %250 = vset.pattern.permute.xlu0 0
    %251 = vperm.xlu0 %250, %v232
    %v252 = vpop.permute.xlu0 %251
    %v254 = vlaneseq
    %v255 = vshrl.u32 %v254, 7
    %v256 = vsub.s32 0, %v255
    %v257 = vrot.slane %v233, %v256
    %v258 = vmul.f32 %v237, %v257
    %v259 = vmul.f32 %v242, %v257
    %v260 = vmul.f32 %v247, %v257
    %v261 = vmul.f32 %v252, %v257
    %262 = vset.pattern.permute.xlu0 1
    %263 = vperm.xlu0 %262, %v187
    %v264 = vpop.permute.xlu0 %263
    %266 = vset.pattern.permute.xlu0 1
    %267 = vperm.xlu0 %266, %v202
    %v268 = vpop.permute.xlu0 %267
    %270 = vset.pattern.permute.xlu0 1
    %271 = vperm.xlu0 %270, %v217
    %v272 = vpop.permute.xlu0 %271
    %274 = vset.pattern.permute.xlu0 1
    %275 = vperm.xlu0 %274, %v232
    %v276 = vpop.permute.xlu0 %275
    %v278 = vlaneseq
    %v279 = vshrl.u32 %v278, 7
    %v280 = vsub.s32 1, %v279
    %v281 = vrot.slane %v233, %v280
    %v282 = vmul.f32 %v264, %v281
    %v283 = vmul.f32 %v268, %v281
    %v284 = vmul.f32 %v272, %v281
    %v285 = vmul.f32 %v276, %v281
    %v286 = vadd.f32 %v258, %v282
    %v287 = vadd.f32 %v259, %v283
    %v288 = vadd.f32 %v260, %v284
    %v289 = vadd.f32 %v261, %v285
    %290 = vset.pattern.permute.xlu0 2
    %291 = vperm.xlu0 %290, %v187
    %v292 = vpop.permute.xlu0 %291
    %294 = vset.pattern.permute.xlu0 2
    %295 = vperm.xlu0 %294, %v202
    %v296 = vpop.permute.xlu0 %295
    %298 = vset.pattern.permute.xlu0 2
    %299 = vperm.xlu0 %298, %v217
    %v300 = vpop.permute.xlu0 %299
    %302 = vset.pattern.permute.xlu0 2
    %303 = vperm.xlu0 %302, %v232
    %v304 = vpop.permute.xlu0 %303
    %v306 = vlaneseq
    %v307 = vshrl.u32 %v306, 7
    %v308 = vsub.s32 2, %v307
    %v309 = vrot.slane %v233, %v308
    %v310 = vmul.f32 %v292, %v309
    %v311 = vmul.f32 %v296, %v309
    %v312 = vmul.f32 %v300, %v309
    %v313 = vmul.f32 %v304, %v309
    %v314 = vadd.f32 %v286, %v310
    %v315 = vadd.f32 %v287, %v311
    %v316 = vadd.f32 %v288, %v312
    %v317 = vadd.f32 %v289, %v313
    %318 = vset.pattern.permute.xlu0 3
    %319 = vperm.xlu0 %318, %v187
    %v320 = vpop.permute.xlu0 %319
    %322 = vset.pattern.permute.xlu0 3
    %323 = vperm.xlu0 %322, %v202
    %v324 = vpop.permute.xlu0 %323
    %326 = vset.pattern.permute.xlu0 3
    %327 = vperm.xlu0 %326, %v217
    %v328 = vpop.permute.xlu0 %327
    %330 = vset.pattern.permute.xlu0 3
    %331 = vperm.xlu0 %330, %v232
    %v332 = vpop.permute.xlu0 %331
    %v334 = vlaneseq
    %v335 = vshrl.u32 %v334, 7
    %v336 = vsub.s32 3, %v335
    %v337 = vrot.slane %v233, %v336
    %v338 = vmul.f32 %v320, %v337
    %v339 = vmul.f32 %v324, %v337
    %v340 = vmul.f32 %v328, %v337
    %v341 = vmul.f32 %v332, %v337
    %v342 = vadd.f32 %v314, %v338
    %v343 = vadd.f32 %v315, %v339
    %v344 = vadd.f32 %v316, %v340
    %v345 = vadd.f32 %v317, %v341
    %v346 = vstv %s31
    %vm347 = vcmp.eq.s32.totalorder %v86, %v346
    %v348 = vsel %vm347, 1, 0
    %v349 = vcvt.s32.f32 %v348
    %v350 = vmul.f32 %v114, %v349
    %v351 = vmul.f32 %v115, %v349
    %v352 = vsel %vm95, %v350, 0.0
    %353 = vadd.xlane.f32.xlu0 %v352
    %v354 = vpop.xlane.xlu0 %353
    %v355 = vsel %vm95, %v351, 0.0
    %356 = vadd.xlane.f32.xlu0 %v355
    %v357 = vpop.xlane.xlu0 %356
    %v358 = vmul.f32 %v354, %v342
    %v359 = vmul.f32 %v357, %v343
    %v360 = vmul.f32 %v354, %v344
    %v361 = vmul.f32 %v357, %v345
    %v362 = vsel %vm137, %v358, 0.0
    %v363 = vsel %vm137, %v359, 0.0
    %v364 = vadd.f32 %v362, %v363
    %v365 = vrot.slane %v364, 4
    %v366 = vadd.f32 %v364, %v365
    %v367 = vrot.slane %v366, 2
    %v368 = vadd.f32 %v366, %v367
    %v369 = vrot.slane %v368, 1
    %v370 = vadd.f32 %v368, %v369
    %v371 = vsel %vm137, %v360, 0.0
    %v372 = vsel %vm137, %v361, 0.0
    %v373 = vadd.f32 %v371, %v372
    %v374 = vrot.slane %v373, 4
    %v375 = vadd.f32 %v373, %v374
    %v376 = vrot.slane %v375, 2
    %v377 = vadd.f32 %v375, %v376
    %v378 = vrot.slane %v377, 1
    %v379 = vadd.f32 %v377, %v378
    %v380 = vmul.f32 %v140, %v370
    %v381 = vmul.f32 %v140, %v379
    %382 = vst.msk [vmem:[%s6] sm:$0xff] %vm137, %v380
    %383 = vst.msk [vmem:[%s6 + $0x8] sm:$0xff] %vm137, %v381
    // Predicated region
    $region26: #{_explainer_forward_impl.1} parent=1 // pred_check
      _
    $region27: #{_explainer_forward_impl.1} parent=1 // pred_check_branch
      %385 = sbr.rel (0) target = $region29
    $region28: #{_explainer_forward_impl.1} parent=1 // pred_region
      _
    $region29: #{_explainer_forward_impl.1} parent=1 // pred_fallthru
      _
    // Predicated region
    $region30: #{_explainer_forward_impl.1} parent=1 // pred_check
      _
    $region31: #{_explainer_forward_impl.1} parent=1 // pred_check_branch
      %387 = sbr.rel (0) target = $region33
    $region32: #{_explainer_forward_impl.1} parent=1 // pred_region
      %s389 = ssub.s32 256, 256
      %390 = vsyncadd [#allocation4], %s389
      %s391 = sshll.u32 [#allocation3], 4
      %s392 = int_to_ptr.vmem [resolvable:$true] %s391
      %397 = dma.vmem_to_hbm [thread:$0]  %s392, 256, %s7, [#allocation4], 128, 128, 8
    $region33: #{_explainer_forward_impl.1} parent=1 // pred_fallthru
      _
    // Predicated region
    $region34: #{_explainer_forward_impl.1} parent=1 // pred_check
      _
    $region35: #{_explainer_forward_impl.1} parent=1 // pred_check_branch
      %399 = sbr.rel (0) target = $region37
    $region36: #{_explainer_forward_impl.1} parent=1 // pred_region
      _
    $region37: #{_explainer_forward_impl.1} parent=1 // pred_fallthru
      _
    // Predicated region
    $region38: #{_explainer_forward_impl.1} parent=1 // pred_check
      _
    $region39: #{_explainer_forward_impl.1} parent=1 // pred_check_branch
      %401 = sbr.rel (0) target = $region41
    $region40: #{_explainer_forward_impl.1} parent=1 // pred_region
      %402 = dma.done [#allocation4], 256
    $region41: #{_explainer_forward_impl.1} parent=1 // pred_fallthru
      _
    %403 = vsyncpa [#allocation4], 1

</llo_original>
